<compile_context>
chip_gen: v6e
topology: v6e:2x2x1
jax: 0.10.0
libtpu: 0.0.40
codegen_flags: <defaults>
</compile_context>

<pallas_src>
import functools

import jax
import jax.numpy as jnp
from jax.experimental import pallas as pl
from jax.experimental.pallas import tpu as pltpu

_LANE = 128      # lane width (last dim granularity)
_SUBLANE = 8     # sublane width (second-to-last dim granularity)
_MIB = 1024 * 1024


def _round_up(n, m):
    return ((n + m - 1) // m) * m


def _pick_tile(dim, cap=512):
    """Largest multiple of 128 <= cap that divides `dim` (dim % 128 == 0)."""
    t = min(dim, cap)
    while dim % t:
        t -= _LANE
    return t


def _vmem_capacity_bytes():
    """Per-core VMEM capacity; conservative 64 MiB (v7x per-TC) if unqueryable."""
    try:
        return int(pltpu.get_tpu_info().vmem_capacity_bytes)
    except Exception:
        return 64 * _MIB


# ----------------------------------------------------------------------------
# Kernels
# ----------------------------------------------------------------------------
def _fused_mlp_kernel(*refs, num_layers, relu_flags):
    """refs = (x_ref, w0_ref, b0_ref, ..., w{L-1}_ref, b{L-1}_ref, o_ref).

    One kernel computes the whole MLP for a (tb, in_pad) batch tile.  The
    chain of matmuls runs on the MXU with f32 accumulation; bias add + ReLU
    stay in f32 on the VPU; intermediates never leave VMEM/vregs.
    """
    x_ref = refs[0]
    o_ref = refs[-1]

    h = x_ref[...].astype(jnp.float32)
    for l in range(num_layers):
        w_ref = refs[1 + 2 * l]
        b_ref = refs[2 + 2 * l]
        # Cast activations to the weight dtype (f32 or bf16) for the MXU;
        # accumulate in f32.
        h = jnp.dot(h.astype(w_ref.dtype), w_ref[...],
                    preferred_element_type=jnp.float32)
        h = h + b_ref[...].astype(jnp.float32)
        if relu_flags[l]:
            h = jnp.maximum(h, 0.0)
    o_ref[...] = h.astype(o_ref.dtype)


def _linear_kernel(x_ref, w_ref, b_ref, o_ref, acc_ref, *, relu):
    """K-tiled single Linear (+ optional ReLU) for the weight-streaming path."""
    k = pl.program_id(2)

    @pl.when(k == 0)
    def _():
        acc_ref[...] = jnp.zeros_like(acc_ref)

    acc_ref[...] += jnp.dot(x_ref[...].astype(w_ref.dtype), w_ref[...],
                            preferred_element_type=jnp.float32)

    @pl.when(k == pl.num_programs(2) - 1)
    def _():
        h = acc_ref[...] + b_ref[...].astype(jnp.float32)
        if relu:
            h = jnp.maximum(h, 0.0)
        o_ref[...] = h.astype(o_ref.dtype)


# ----------------------------------------------------------------------------
# Parameters
# ----------------------------------------------------------------------------
def init_mlp_params(key, input_dim, layer_widths):
    """PyTorch-Linear-style init: W, b ~ U(-1/sqrt(fan_in), +1/sqrt(fan_in))."""
    params = []
    prev = input_dim
    for width in layer_widths:
        key, kw, kb = jax.random.split(key, 3)
        bound = 1.0 / (prev ** 0.5)
        w = jax.random.uniform(kw, (width, prev), jnp.float32, -bound, bound)
        b = jax.random.uniform(kb, (width,), jnp.float32, -bound, bound)
        params.append((w, b))
        prev = width
    return params


def prepare_mlp_params(params, param_dtype=jnp.float32, lane_multiple=_LANE):
    """One-time layout plumbing (hoisted out of the forward path).

    Transposes each weight to (in, out) and zero-pads both feature dims to the
    lane multiple (pass lane_multiple=256 for wide layers on v6e/v7x; dims
    <= 128 always pad to 128); biases become (1, out_pad).  Optionally casts
    parameters to bf16 for the MXU-native fast path.
    """
    def _pad(dim):
        return _round_up(dim, lane_multiple if dim > _LANE else _LANE)

    prepared = []
    for w, b in params:
        out_dim, in_dim = w.shape
        in_pad, out_pad = _pad(in_dim), _pad(out_dim)
        w_t = jnp.zeros((in_pad, out_pad), param_dtype)
        w_t = w_t.at[:in_dim, :out_dim].set(w.T.astype(param_dtype))
        b_p = jnp.zeros((1, out_pad), param_dtype)
        b_p = b_p.at[0, :out_dim].set(b.astype(param_dtype))
        prepared.append((w_t, b_p))
    return prepared


# ----------------------------------------------------------------------------
# Forward paths
# ----------------------------------------------------------------------------
def _mlp_forward_fused(x_in, prepared_params, relu_flags, tb, out_pad,
                       vmem_limit, cost):
    B_pad, in_pad = x_in.shape
    num_layers = len(prepared_params)
    kernel = functools.partial(_fused_mlp_kernel, num_layers=num_layers,
                               relu_flags=relu_flags)

    def build(use_buffered):
        in_specs = [pl.BlockSpec((tb, in_pad), lambda i: (i, 0))]
        flat_params = []
        for w_t, b_p in prepared_params:
            if use_buffered:
                # Constant index_map => the block never changes; a single
                # buffer keeps the weights resident without doubling VMEM.
                in_specs.append(pl.BlockSpec(w_t.shape, lambda i: (0, 0),
                                             pipeline_mode=pl.Buffered(1)))
                in_specs.append(pl.BlockSpec(b_p.shape, lambda i: (0, 0),
                                             pipeline_mode=pl.Buffered(1)))
            else:
                in_specs.append(pl.BlockSpec(w_t.shape, lambda i: (0, 0)))
                in_specs.append(pl.BlockSpec(b_p.shape, lambda i: (0, 0)))
            flat_params.append(w_t)
            flat_params.append(b_p)

        return pl.pallas_call(
            kernel,
            out_shape=jax.ShapeDtypeStruct((B_pad, out_pad), x_in.dtype),
            grid=(B_pad // tb,),
            in_specs=in_specs,
            out_specs=pl.BlockSpec((tb, out_pad), lambda i: (i, 0)),
            compiler_params=pltpu.CompilerParams(
                dimension_semantics=("parallel",),
                vmem_limit_bytes=vmem_limit),
            cost_estimate=cost,
        )(x_in, *flat_params)

    try:
        return build(use_buffered=True)
    except Exception:
        # Older jax without BlockSpec.pipeline_mode / Buffered(1) support on
        # the top-level pipeline: fall back to default double-buffering.
        return build(use_buffered=False)


def _linear_pallas(x_p, w_t, b_p, relu, tb, vmem_cap):
    """One Linear layer as its own K/N-tiled pallas_call (weights streamed)."""
    B_pad, K_pad = x_p.shape
    _, N_pad = w_t.shape
    tk = _pick_tile(K_pad)
    tn = _pick_tile(N_pad)
    need = (2 * (tb * tk + tk * tn + tn) * w_t.dtype.itemsize
            + 2 * tb * tn * x_p.dtype.itemsize
            + tb * tn * 4 + 2 * _MIB)
    vmem_limit = min(int(0.85 * vmem_cap), max(32 * _MIB, need))
    kernel = functools.partial(_linear_kernel, relu=relu)
    return pl.pallas_call(
        kernel,
        out_shape=jax.ShapeDtypeStruct((B_pad, N_pad), x_p.dtype),
        grid=(B_pad // tb, N_pad // tn, K_pad // tk),
        in_specs=[pl.BlockSpec((tb, tk), lambda i, j, k: (i, k)),
                  pl.BlockSpec((tk, tn), lambda i, j, k: (k, j)),
                  pl.BlockSpec((1, tn), lambda i, j, k: (0, j))],
        out_specs=pl.BlockSpec((tb, tn), lambda i, j, k: (i, j)),
        scratch_shapes=[pltpu.VMEM((tb, tn), jnp.float32)],
        compiler_params=pltpu.CompilerParams(
            dimension_semantics=("parallel", "parallel", "arbitrary"),
            vmem_limit_bytes=vmem_limit),
    )(x_p, w_t, b_p)


def _mlp_forward_streaming(x_in, prepared_params, relu_flags, tb, vmem_cap):
    h = x_in
    for (w_t, b_p), relu in zip(prepared_params, relu_flags):
        h = _linear_pallas(h, w_t, b_p, relu, tb, vmem_cap)
    return h


def mlp_forward(x, prepared_params, out_dim, activate_final=False,
                batch_block=256, force_streaming=False):
    """MLP forward.  x: (B, input_dim).  Returns (B, out_dim)."""
    num_layers = len(prepared_params)
    B, in_dim = x.shape
    in_pad = prepared_params[0][0].shape[0]
    out_pad = prepared_params[-1][0].shape[1]
    max_pad = max([in_pad] + [w.shape[1] for w, _ in prepared_params])

    # --- batch tile (multiple of 8 sublanes) -------------------------------
    tb = min(batch_block, _round_up(B, _SUBLANE))
    # v7x megacore: if the whole batch fits one big tile but can be cleanly
    # split into two >=128-row tiles, split so the "parallel" grid axis has
    # >= 2 steps and both TensorCores get work.
    if tb == _round_up(B, _SUBLANE) and tb >= 2 * _LANE and tb % (2 * _SUBLANE) == 0:
        tb //= 2
    B_pad = _round_up(B, tb)

    # --- zero-pad the input only when actually needed ----------------------
    if (B_pad != B) or (in_pad != in_dim):
        x_in = jnp.zeros((B_pad, in_pad), x.dtype).at[:B, :in_dim].set(x)
    else:
        x_in = x

    relu_flags = tuple((i < num_layers - 1) or activate_final
                       for i in range(num_layers))

    # --- VMEM budget / cost estimate ----------------------------------------
    nbytes = lambda a: a.size * a.dtype.itemsize
    param_bytes = sum(nbytes(w) + nbytes(b) for w, b in prepared_params)
    io_bytes = 2 * 2 * tb * (in_pad + out_pad) * x.dtype.itemsize   # dbl-buffered x/out tiles
    h_bytes = 2 * tb * max_pad * 4                                  # live f32 intermediates
    vmem_cap = _vmem_capacity_bytes()
    # Conservative: assume weights end up double-buffered if Buffered(1) is
    # unavailable on this jax version.
    fused_need = 2 * param_bytes + io_bytes + h_bytes + 2 * _MIB
    vmem_limit = min(int(0.85 * vmem_cap), max(32 * _MIB, fused_need))

    flops = 2 * B_pad * sum(w.shape[0] * w.shape[1] for w, _ in prepared_params)
    bytes_accessed = param_bytes + nbytes(x_in) + B_pad * out_pad * x.dtype.itemsize
    cost = pl.CostEstimate(flops=flops, transcendentals=0,
                           bytes_accessed=bytes_accessed)

    if force_streaming or fused_need > int(0.7 * vmem_cap):
        out_arr = _mlp_forward_streaming(x_in, prepared_params, relu_flags,
                                         tb, vmem_cap)
    else:
        out_arr = _mlp_forward_fused(x_in, prepared_params, relu_flags, tb,
                                     out_pad, vmem_limit, cost)

    # Slice only when padding was introduced (padded rows/cols hold garbage).
    if (B_pad != B) or (out_pad != out_dim):
        out_arr = out_arr[:B, :out_dim]
    return out_arr


# ----------------------------------------------------------------------------
# Reference + demo
# ----------------------------------------------------------------------------
def mlp_reference(x, params, activate_final=False):
    n = len(params)
    for i, (w, b) in enumerate(params):
        x = x @ w.T + b
        if i < n - 1 or activate_final:
            x = jnp.maximum(x, 0.0)
    return x


if __name__ == "__main__":
    key = jax.random.PRNGKey(0)
    key, kx = jax.random.split(key)

    batch = 8
    input_dim = 32
    layer_widths = [64, 48, 16]

    x = jax.random.normal(kx, (batch, input_dim), jnp.float32)
    params = init_mlp_params(key, input_dim, layer_widths)
    ref = mlp_reference(x, params, activate_final=False)

    # Layout plumbing happens ONCE here, not per forward call.
    prepared_f32 = prepare_mlp_params(params, param_dtype=jnp.float32)

    # Fused path, f32 params (strict tolerance).
    out = mlp_forward(x, prepared_f32, out_dim=layer_widths[-1],
                      activate_final=False)
    out = jax.block_until_ready(out)
    assert out.shape == (batch, layer_widths[-1])
    assert jnp.allclose(out, ref, atol=1e-4, rtol=1e-4)

    # Weight-streaming fallback path (used automatically for VMEM-oversized
    # MLPs); exercised explicitly here for correctness.
    out_stream = mlp_forward(x, prepared_f32, out_dim=layer_widths[-1],
                             activate_final=False, force_streaming=True)
    out_stream = jax.block_until_ready(out_stream)
    assert jnp.allclose(out_stream, ref, atol=1e-4, rtol=1e-4)

    # bf16 parameter path (MXU-native dtype), f32 accumulation; looser tol.
    prepared_bf16 = prepare_mlp_params(params, param_dtype=jnp.bfloat16)
    out_bf16 = mlp_forward(x, prepared_bf16, out_dim=layer_widths[-1],
                           activate_final=False)
    out_bf16 = jax.block_until_ready(out_bf16)
    assert jnp.allclose(out_bf16, ref, atol=5e-2, rtol=5e-2)

    print("KERNEL_OK")
</pallas_src>

<mosaic_0001>
module attributes {stable_mosaic.version = 11 : i64} {
  func.func @_fused_mlp_kernel(%arg0: i32, %arg1: memref<8x128xf32, #tpu.memory_space<vmem>>, %arg2: memref<128x128xf32, #tpu.memory_space<vmem>>, %arg3: memref<1x128xf32, #tpu.memory_space<vmem>>, %arg4: memref<128x128xf32, #tpu.memory_space<vmem>>, %arg5: memref<1x128xf32, #tpu.memory_space<vmem>>, %arg6: memref<128x128xf32, #tpu.memory_space<vmem>>, %arg7: memref<1x128xf32, #tpu.memory_space<vmem>>, %arg8: memref<8x128xf32, #tpu.memory_space<vmem>>) attributes {dimension_semantics = [#tpu.dimension_semantics<parallel>], iteration_bounds = array<i64: 1>, scalar_prefetch = 0 : i64, scratch_operands = 0 : i64, tpu.core_type = #tpu.core_type<tc>, window_params = [{transform_indices = @transform_0, window_bounds = array<i64: 8, 128>}, {pipeline_mode = #tpu.pipeline_mode<synchronous>, transform_indices = @transform_1, window_bounds = array<i64: 128, 128>}, {pipeline_mode = #tpu.pipeline_mode<synchronous>, transform_indices = @transform_2, window_bounds = array<i64: 1, 128>}, {pipeline_mode = #tpu.pipeline_mode<synchronous>, transform_indices = @transform_3, window_bounds = array<i64: 128, 128>}, {pipeline_mode = #tpu.pipeline_mode<synchronous>, transform_indices = @transform_4, window_bounds = array<i64: 1, 128>}, {pipeline_mode = #tpu.pipeline_mode<synchronous>, transform_indices = @transform_5, window_bounds = array<i64: 128, 128>}, {pipeline_mode = #tpu.pipeline_mode<synchronous>, transform_indices = @transform_6, window_bounds = array<i64: 1, 128>}, {transform_indices = @transform_7, window_bounds = array<i64: 8, 128>}]} {
    %c0 = arith.constant 0 : index
    %c0_0 = arith.constant 0 : index
    %0 = vector.load %arg1[%c0, %c0_0] : memref<8x128xf32, #tpu.memory_space<vmem>>, vector<8x128xf32>
    %c0_1 = arith.constant 0 : index
    %c0_2 = arith.constant 0 : index
    %1 = vector.load %arg2[%c0_1, %c0_2] : memref<128x128xf32, #tpu.memory_space<vmem>>, vector<128x128xf32>
    %cst = arith.constant dense<0.000000e+00> : vector<8x128xf32>
    %2 = tpu.matmul %0, %1, %cst {dimension_numbers = #tpu.dot_dimension_numbers<[1], [0], [0], [1], [0, 0, 1, 1], [], []>} : vector<8x128xf32>, vector<128x128xf32>, vector<8x128xf32> -> vector<8x128xf32>
    %c0_3 = arith.constant 0 : index
    %c0_4 = arith.constant 0 : index
    %3 = vector.load %arg3[%c0_3, %c0_4] : memref<1x128xf32, #tpu.memory_space<vmem>>, vector<1x128xf32>
    %4 = vector.broadcast %3 : vector<1x128xf32> to vector<8x128xf32>
    %5 = arith.addf %2, %4 : vector<8x128xf32>
    %cst_5 = arith.constant 0.000000e+00 : f32
    %6 = vector.broadcast %cst_5 : f32 to vector<8x128xf32>
    %7 = arith.maximumf %5, %6 : vector<8x128xf32>
    %c0_6 = arith.constant 0 : index
    %c0_7 = arith.constant 0 : index
    %8 = vector.load %arg4[%c0_6, %c0_7] : memref<128x128xf32, #tpu.memory_space<vmem>>, vector<128x128xf32>
    %cst_8 = arith.constant dense<0.000000e+00> : vector<8x128xf32>
    %9 = tpu.matmul %7, %8, %cst_8 {dimension_numbers = #tpu.dot_dimension_numbers<[1], [0], [0], [1], [0, 0, 1, 1], [], []>} : vector<8x128xf32>, vector<128x128xf32>, vector<8x128xf32> -> vector<8x128xf32>
    %c0_9 = arith.constant 0 : index
    %c0_10 = arith.constant 0 : index
    %10 = vector.load %arg5[%c0_9, %c0_10] : memref<1x128xf32, #tpu.memory_space<vmem>>, vector<1x128xf32>
    %11 = vector.broadcast %10 : vector<1x128xf32> to vector<8x128xf32>
    %12 = arith.addf %9, %11 : vector<8x128xf32>
    %cst_11 = arith.constant 0.000000e+00 : f32
    %13 = vector.broadcast %cst_11 : f32 to vector<8x128xf32>
    %14 = arith.maximumf %12, %13 : vector<8x128xf32>
    %c0_12 = arith.constant 0 : index
    %c0_13 = arith.constant 0 : index
    %15 = vector.load %arg6[%c0_12, %c0_13] : memref<128x128xf32, #tpu.memory_space<vmem>>, vector<128x128xf32>
    %cst_14 = arith.constant dense<0.000000e+00> : vector<8x128xf32>
    %16 = tpu.matmul %14, %15, %cst_14 {dimension_numbers = #tpu.dot_dimension_numbers<[1], [0], [0], [1], [0, 0, 1, 1], [], []>} : vector<8x128xf32>, vector<128x128xf32>, vector<8x128xf32> -> vector<8x128xf32>
    %c0_15 = arith.constant 0 : index
    %c0_16 = arith.constant 0 : index
    %17 = vector.load %arg7[%c0_15, %c0_16] : memref<1x128xf32, #tpu.memory_space<vmem>>, vector<1x128xf32>
    %18 = vector.broadcast %17 : vector<1x128xf32> to vector<8x128xf32>
    %19 = arith.addf %16, %18 : vector<8x128xf32>
    %c0_17 = arith.constant 0 : index
    %c0_18 = arith.constant 0 : index
    %20 = vector.load %arg8[%c0_17, %c0_18] : memref<8x128xf32, #tpu.memory_space<vmem>>, vector<8x128xf32>
    tpu.vector_store %arg8[%c0_17, %c0_18], %19 {strides = array<i32>} : memref<8x128xf32, #tpu.memory_space<vmem>>, vector<8x128xf32>,
    return
  }
  func.func @transform_0(%arg0: i32) -> (i32, i32) {
    %c0_i32 = arith.constant 0 : i32
    %c0_i32_0 = arith.constant 0 : i32
    return %arg0, %c0_i32 : i32, i32
  }
  func.func @transform_1(%arg0: i32) -> (i32, i32) {
    %c0_i32 = arith.constant 0 : i32
    %c0_i32_0 = arith.constant 0 : i32
    %c0_i32_1 = arith.constant 0 : i32
    return %c0_i32, %c0_i32_0 : i32, i32
  }
  func.func @transform_2(%arg0: i32) -> (i32, i32) {
    %c0_i32 = arith.constant 0 : i32
    %c0_i32_0 = arith.constant 0 : i32
    %c0_i32_1 = arith.constant 0 : i32
    return %c0_i32, %c0_i32_0 : i32, i32
  }
  func.func @transform_3(%arg0: i32) -> (i32, i32) {
    %c0_i32 = arith.constant 0 : i32
    %c0_i32_0 = arith.constant 0 : i32
    %c0_i32_1 = arith.constant 0 : i32
    return %c0_i32, %c0_i32_0 : i32, i32
  }
  func.func @transform_4(%arg0: i32) -> (i32, i32) {
    %c0_i32 = arith.constant 0 : i32
    %c0_i32_0 = arith.constant 0 : i32
    %c0_i32_1 = arith.constant 0 : i32
    return %c0_i32, %c0_i32_0 : i32, i32
  }
  func.func @transform_5(%arg0: i32) -> (i32, i32) {
    %c0_i32 = arith.constant 0 : i32
    %c0_i32_0 = arith.constant 0 : i32
    %c0_i32_1 = arith.constant 0 : i32
    return %c0_i32, %c0_i32_0 : i32, i32
  }
  func.func @transform_6(%arg0: i32) -> (i32, i32) {
    %c0_i32 = arith.constant 0 : i32
    %c0_i32_0 = arith.constant 0 : i32
    %c0_i32_1 = arith.constant 0 : i32
    return %c0_i32, %c0_i32_0 : i32, i32
  }
  func.func @transform_7(%arg0: i32) -> (i32, i32) {
    %c0_i32 = arith.constant 0 : i32
    %c0_i32_0 = arith.constant 0 : i32
    return %arg0, %c0_i32 : i32, i32
  }
}

module attributes {stable_mosaic.version = 11 : i64} {
  func.func @_fused_mlp_kernel(%arg0: i32, %arg1: memref<8x128xf32, #tpu.memory_space<vmem>>, %arg2: memref<128x128xf32, #tpu.memory_space<vmem>>, %arg3: memref<1x128xf32, #tpu.memory_space<vmem>>, %arg4: memref<128x128xf32, #tpu.memory_space<vmem>>, %arg5: memref<1x128xf32, #tpu.memory_space<vmem>>, %arg6: memref<128x128xf32, #tpu.memory_space<vmem>>, %arg7: memref<1x128xf32, #tpu.memory_space<vmem>>, %arg8: memref<8x128xf32, #tpu.memory_space<vmem>>) attributes {dimension_semantics = [#tpu.dimension_semantics<parallel>], iteration_bounds = array<i64: 1>, scalar_prefetch = 0 : i64, scratch_operands = 0 : i64, tpu.core_type = #tpu.core_type<tc>, window_params = [{transform_indices = @transform_0, window_bounds = array<i64: 8, 128>}, {pipeline_mode = #tpu.pipeline_mode<synchronous>, transform_indices = @transform_1, window_bounds = array<i64: 128, 128>}, {pipeline_mode = #tpu.pipeline_mode<synchronous>, transform_indices = @transform_2, window_bounds = array<i64: 1, 128>}, {pipeline_mode = #tpu.pipeline_mode<synchronous>, transform_indices = @transform_3, window_bounds = array<i64: 128, 128>}, {pipeline_mode = #tpu.pipeline_mode<synchronous>, transform_indices = @transform_4, window_bounds = array<i64: 1, 128>}, {pipeline_mode = #tpu.pipeline_mode<synchronous>, transform_indices = @transform_5, window_bounds = array<i64: 128, 128>}, {pipeline_mode = #tpu.pipeline_mode<synchronous>, transform_indices = @transform_6, window_bounds = array<i64: 1, 128>}, {transform_indices = @transform_7, window_bounds = array<i64: 8, 128>}]} {
    %c0 = arith.constant 0 : index
    %c0_0 = arith.constant 0 : index
    %0 = vector.load %arg1[%c0, %c0_0] : memref<8x128xf32, #tpu.memory_space<vmem>>, vector<8x128xf32>
    %c0_1 = arith.constant 0 : index
    %c0_2 = arith.constant 0 : index
    %1 = vector.load %arg2[%c0_1, %c0_2] : memref<128x128xf32, #tpu.memory_space<vmem>>, vector<128x128xf32>
    %cst = arith.constant dense<0.000000e+00> : vector<8x128xf32>
    %2 = tpu.matmul %0, %1, %cst {dimension_numbers = #tpu.dot_dimension_numbers<[1], [0], [0], [1], [0, 0, 1, 1], [], []>} : vector<8x128xf32>, vector<128x128xf32>, vector<8x128xf32> -> vector<8x128xf32>
    %c0_3 = arith.constant 0 : index
    %c0_4 = arith.constant 0 : index
    %3 = vector.load %arg3[%c0_3, %c0_4] : memref<1x128xf32, #tpu.memory_space<vmem>>, vector<1x128xf32>
    %4 = vector.broadcast %3 : vector<1x128xf32> to vector<8x128xf32>
    %5 = arith.addf %2, %4 : vector<8x128xf32>
    %cst_5 = arith.constant 0.000000e+00 : f32
    %6 = vector.broadcast %cst_5 : f32 to vector<8x128xf32>
    %7 = arith.maximumf %5, %6 : vector<8x128xf32>
    %c0_6 = arith.constant 0 : index
    %c0_7 = arith.constant 0 : index
    %8 = vector.load %arg4[%c0_6, %c0_7] : memref<128x128xf32, #tpu.memory_space<vmem>>, vector<128x128xf32>
    %cst_8 = arith.constant dense<0.000000e+00> : vector<8x128xf32>
    %9 = tpu.matmul %7, %8, %cst_8 {dimension_numbers = #tpu.dot_dimension_numbers<[1], [0], [0], [1], [0, 0, 1, 1], [], []>} : vector<8x128xf32>, vector<128x128xf32>, vector<8x128xf32> -> vector<8x128xf32>
    %c0_9 = arith.constant 0 : index
    %c0_10 = arith.constant 0 : index
    %10 = vector.load %arg5[%c0_9, %c0_10] : memref<1x128xf32, #tpu.memory_space<vmem>>, vector<1x128xf32>
    %11 = vector.broadcast %10 : vector<1x128xf32> to vector<8x128xf32>
    %12 = arith.addf %9, %11 : vector<8x128xf32>
    %cst_11 = arith.constant 0.000000e+00 : f32
    %13 = vector.broadcast %cst_11 : f32 to vector<8x128xf32>
    %14 = arith.maximumf %12, %13 : vector<8x128xf32>
    %c0_12 = arith.constant 0 : index
    %c0_13 = arith.constant 0 : index
    %15 = vector.load %arg6[%c0_12, %c0_13] : memref<128x128xf32, #tpu.memory_space<vmem>>, vector<128x128xf32>
    %cst_14 = arith.constant dense<0.000000e+00> : vector<8x128xf32>
    %16 = tpu.matmul %14, %15, %cst_14 {dimension_numbers = #tpu.dot_dimension_numbers<[1], [0], [0], [1], [0, 0, 1, 1], [], []>} : vector<8x128xf32>, vector<128x128xf32>, vector<8x128xf32> -> vector<8x128xf32>
    %c0_15 = arith.constant 0 : index
    %c0_16 = arith.constant 0 : index
    %17 = vector.load %arg7[%c0_15, %c0_16] : memref<1x128xf32, #tpu.memory_space<vmem>>, vector<1x128xf32>
    %18 = vector.broadcast %17 : vector<1x128xf32> to vector<8x128xf32>
    %19 = arith.addf %16, %18 : vector<8x128xf32>
    %c0_17 = arith.constant 0 : index
    %c0_18 = arith.constant 0 : index
    %20 = vector.load %arg8[%c0_17, %c0_18] : memref<8x128xf32, #tpu.memory_space<vmem>>, vector<8x128xf32>
    tpu.vector_store %arg8[%c0_17, %c0_18], %19 {strides = array<i32>} : memref<8x128xf32, #tpu.memory_space<vmem>>, vector<8x128xf32>,
    return
  }
  func.func @transform_0(%arg0: i32) -> (i32, i32) {
    %c0_i32 = arith.constant 0 : i32
    %c0_i32_0 = arith.constant 0 : i32
    return %arg0, %c0_i32 : i32, i32
  }
  func.func @transform_1(%arg0: i32) -> (i32, i32) {
    %c0_i32 = arith.constant 0 : i32
    %c0_i32_0 = arith.constant 0 : i32
    %c0_i32_1 = arith.constant 0 : i32
    return %c0_i32, %c0_i32_0 : i32, i32
  }
  func.func @transform_2(%arg0: i32) -> (i32, i32) {
    %c0_i32 = arith.constant 0 : i32
    %c0_i32_0 = arith.constant 0 : i32
    %c0_i32_1 = arith.constant 0 : i32
    return %c0_i32, %c0_i32_0 : i32, i32
  }
  func.func @transform_3(%arg0: i32) -> (i32, i32) {
    %c0_i32 = arith.constant 0 : i32
    %c0_i32_0 = arith.constant 0 : i32
    %c0_i32_1 = arith.constant 0 : i32
    return %c0_i32, %c0_i32_0 : i32, i32
  }
  func.func @transform_4(%arg0: i32) -> (i32, i32) {
    %c0_i32 = arith.constant 0 : i32
    %c0_i32_0 = arith.constant 0 : i32
    %c0_i32_1 = arith.constant 0 : i32
    return %c0_i32, %c0_i32_0 : i32, i32
  }
  func.func @transform_5(%arg0: i32) -> (i32, i32) {
    %c0_i32 = arith.constant 0 : i32
    %c0_i32_0 = arith.constant 0 : i32
    %c0_i32_1 = arith.constant 0 : i32
    return %c0_i32, %c0_i32_0 : i32, i32
  }
  func.func @transform_6(%arg0: i32) -> (i32, i32) {
    %c0_i32 = arith.constant 0 : i32
    %c0_i32_0 = arith.constant 0 : i32
    %c0_i32_1 = arith.constant 0 : i32
    return %c0_i32, %c0_i32_0 : i32, i32
  }
  func.func @transform_7(%arg0: i32) -> (i32, i32) {
    %c0_i32 = arith.constant 0 : i32
    %c0_i32_0 = arith.constant 0 : i32
    return %arg0, %c0_i32 : i32, i32
  }
}

</mosaic_0001>

<llo_original>
// kernel: tpu_custom_call.1
$region0: #{tpu_custom_call.1}
  #allocation0 [shape = 'u32[]', space=smem, size = 0x4, offset = 0x4, fixed_abs, tag = 'smem constant byte address 0x4 - core index']
  #allocation1 [shape = 'u32[144,128]{1,0:T(1,128)}', space=vmem, size = 0x12000, scoped, tag = 'internal scratch']
  %s0 = inlined_call_operand.hbm [shape: f32[8,128], index: 0, kind: input, shape index: {}]
  %s1 = inlined_call_operand.hbm [shape: f32[128,128], index: 1, kind: input, shape index: {}]
  %s2 = inlined_call_operand.vmem [shape: f32[1,128], index: 2, kind: input, shape index: {}]
  %s3 = inlined_call_operand.hbm [shape: f32[128,128], index: 3, kind: input, shape index: {}]
  %s4 = inlined_call_operand.vmem [shape: f32[1,128], index: 4, kind: input, shape index: {}]
  %s5 = inlined_call_operand.hbm [shape: f32[128,128], index: 5, kind: input, shape index: {}]
  %s6 = inlined_call_operand.vmem [shape: f32[1,128], index: 6, kind: input, shape index: {}]
  %s7 = inlined_call_operand.hbm [shape: f32[8,128], index: 7, kind: output, shape index: {}]
  %s8 = sld [smem:[#allocation0]]
  $region54: #{tpu_custom_call.1} parent=0
    _
  %s10 = ssub.s32 1, %s8
  %s11 = scalar_select 0, %s10, %s8
  $region1: #{tpu_custom_call.1} parent=0
    #allocation2 [shape = 'u8[4096]{0}', space=vmem, size = 0x1000, scoped, tag = 'input window, operand 0, single buffered']
    #allocation3 [shape = 's32[1]{0}', space=sflag, size = 0x4, scoped, tag = 'scoped memory for tpu_custom_call.1']
    #allocation4 [shape = 's32[1]{0}', space=sflag, size = 0x4, scoped, tag = 'scoped memory for tpu_custom_call.1']
    #allocation5 [shape = 'u8[65536]{0}', space=vmem, size = 0x10000, scoped, tag = 'input window, operand 1, single buffered']
    #allocation6 [shape = 's32[1]{0}', space=sflag, size = 0x4, scoped, tag = 'scoped memory for tpu_custom_call.1']
    #allocation7 [shape = 'u8[65536]{0}', space=vmem, size = 0x10000, scoped, tag = 'input window, operand 3, single buffered']
    #allocation8 [shape = 'u8[65536]{0}', space=vmem, size = 0x10000, scoped, tag = 'input window, operand 5, single buffered']
    #allocation9 [shape = 's32[1]{0}', space=sflag, size = 0x4, scoped, tag = 'scoped memory for tpu_custom_call.1']
    #allocation10 [shape = 'u8[4096]{0}', space=vmem, size = 0x1000, scoped, tag = 'output window, operand 0, single buffered']
    %12 = vsyncpa [#allocation3], 0
    %13 = vsyncpa [#allocation6], 0
    %14 = vsyncpa [#allocation9], 0
    %15 = vsyncpa [#allocation4], 0
    // Predicated region
    $region2: #{tpu_custom_call.1} parent=1 // pred_check
      _
    $region3: #{tpu_custom_call.1} parent=1 // pred_check_branch
      %17 = sbr.rel (0) target = $region5
    $region4: #{tpu_custom_call.1} parent=1 // pred_region
      %s19 = ssub.s32 128, 128
      %20 = vsyncadd [#allocation3], %s19
      %s22 = sshll.u32 [#allocation2], 4
      %s23 = int_to_ptr.vmem [resolvable:$true] %s22
      %25 = dma.hbm_to_vmem [thread:$0]  %s0, 128, %s23, [#allocation3]
    $region5: #{tpu_custom_call.1} parent=1 // pred_fallthru
      _
    // Predicated region
    $region6: #{tpu_custom_call.1} parent=1 // pred_check
      _
    $region7: #{tpu_custom_call.1} parent=1 // pred_check_branch
      %27 = sbr.rel (0) target = $region9
    $region8: #{tpu_custom_call.1} parent=1 // pred_region
      %s29 = ssub.s32 2048, 2048
      %30 = vsyncadd [#allocation6], %s29
      %s31 = sshll.u32 [#allocation5], 4
      %s32 = int_to_ptr.vmem [resolvable:$true] %s31
      %37 = dma.hbm_to_vmem [thread:$0]  %s1, 2048, %s32, [#allocation6], 128, 128, 8
    $region9: #{tpu_custom_call.1} parent=1 // pred_fallthru
      _
    // Predicated region
    $region10: #{tpu_custom_call.1} parent=1 // pred_check
      _
    $region11: #{tpu_custom_call.1} parent=1 // pred_check_branch
      %39 = sbr.rel (0) target = $region13
    $region12: #{tpu_custom_call.1} parent=1 // pred_region
      _
    $region13: #{tpu_custom_call.1} parent=1 // pred_fallthru
      _
    // Predicated region
    $region14: #{tpu_custom_call.1} parent=1 // pred_check
      _
    $region15: #{tpu_custom_call.1} parent=1 // pred_check_branch
      %41 = sbr.rel (0) target = $region17
    $region16: #{tpu_custom_call.1} parent=1 // pred_region
      %s43 = ssub.s32 2048, 2048
      %44 = vsyncadd [#allocation6], %s43
      %s45 = sshll.u32 [#allocation7], 4
      %s46 = int_to_ptr.vmem [resolvable:$true] %s45
      %51 = dma.hbm_to_vmem [thread:$0]  %s3, 2048, %s46, [#allocation6], 128, 128, 8
    $region17: #{tpu_custom_call.1} parent=1 // pred_fallthru
      _
    // Predicated region
    $region18: #{tpu_custom_call.1} parent=1 // pred_check
      _
    $region19: #{tpu_custom_call.1} parent=1 // pred_check_branch
      %53 = sbr.rel (0) target = $region21
    $region20: #{tpu_custom_call.1} parent=1 // pred_region
      _
    $region21: #{tpu_custom_call.1} parent=1 // pred_fallthru
      _
    // Predicated region
    $region22: #{tpu_custom_call.1} parent=1 // pred_check
      _
    $region23: #{tpu_custom_call.1} parent=1 // pred_check_branch
      %55 = sbr.rel (0) target = $region25
    $region24: #{tpu_custom_call.1} parent=1 // pred_region
      %s57 = ssub.s32 2048, 2048
      %58 = vsyncadd [#allocation9], %s57
      %s59 = sshll.u32 [#allocation8], 4
      %s60 = int_to_ptr.vmem [resolvable:$true] %s59
      %65 = dma.hbm_to_vmem [thread:$0]  %s5, 2048, %s60, [#allocation9], 128, 128, 8
    $region25: #{tpu_custom_call.1} parent=1 // pred_fallthru
      _
    // Predicated region
    $region26: #{tpu_custom_call.1} parent=1 // pred_check
      _
    $region27: #{tpu_custom_call.1} parent=1 // pred_check_branch
      %67 = sbr.rel (0) target = $region29
    $region28: #{tpu_custom_call.1} parent=1 // pred_region
      _
    $region29: #{tpu_custom_call.1} parent=1 // pred_fallthru
      _
    // Predicated region
    $region30: #{tpu_custom_call.1} parent=1 // pred_check
      _
    $region31: #{tpu_custom_call.1} parent=1 // pred_check_branch
      %69 = sbr.rel (0) target = $region33
    $region32: #{tpu_custom_call.1} parent=1 // pred_region
      %70 = dma.done [#allocation3], 128
    $region33: #{tpu_custom_call.1} parent=1 // pred_fallthru
      _
    // Predicated region
    $region34: #{tpu_custom_call.1} parent=1 // pred_check
      _
    $region35: #{tpu_custom_call.1} parent=1 // pred_check_branch
      %72 = sbr.rel (0) target = $region37
    $region36: #{tpu_custom_call.1} parent=1 // pred_region
      %73 = dma.done [#allocation6], 2048
    $region37: #{tpu_custom_call.1} parent=1 // pred_fallthru
      _
    // Predicated region
    $region38: #{tpu_custom_call.1} parent=1 // pred_check
      _
    $region39: #{tpu_custom_call.1} parent=1 // pred_check_branch
      %75 = sbr.rel (0) target = $region41
    $region40: #{tpu_custom_call.1} parent=1 // pred_region
      %76 = dma.done [#allocation6], 2048
    $region41: #{tpu_custom_call.1} parent=1 // pred_fallthru
      _
    // Predicated region
    $region42: #{tpu_custom_call.1} parent=1 // pred_check
      _
    $region43: #{tpu_custom_call.1} parent=1 // pred_check_branch
      %78 = sbr.rel (0) target = $region45
    $region44: #{tpu_custom_call.1} parent=1 // pred_region
      %79 = dma.done [#allocation9], 2048
    $region45: #{tpu_custom_call.1} parent=1 // pred_fallthru
      _
    %v80 = vld [vmem:[#allocation2] sm:$0xff]
    %v81 = vld [vmem:[#allocation5] sm:$0xff]
    %v82 = vld [vmem:[#allocation5 + $0x8] sm:$0xff]
    %v83 = vld [vmem:[#allocation5 + $0x10] sm:$0xff]
    %v84 = vld [vmem:[#allocation5 + $0x18] sm:$0xff]
    %v85 = vld [vmem:[#allocation5 + $0x20] sm:$0xff]
    %v86 = vld [vmem:[#allocation5 + $0x28] sm:$0xff]
    %v87 = vld [vmem:[#allocation5 + $0x30] sm:$0xff]
    %v88 = vld [vmem:[#allocation5 + $0x38] sm:$0xff]
    %v89 = vld [vmem:[#allocation5 + $0x40] sm:$0xff]
    %v90 = vld [vmem:[#allocation5 + $0x48] sm:$0xff]
    %v91 = vld [vmem:[#allocation5 + $0x50] sm:$0xff]
    %v92 = vld [vmem:[#allocation5 + $0x58] sm:$0xff]
    %v93 = vld [vmem:[#allocation5 + $0x60] sm:$0xff]
    %v94 = vld [vmem:[#allocation5 + $0x68] sm:$0xff]
    %v95 = vld [vmem:[#allocation5 + $0x70] sm:$0xff]
    %v96 = vld [vmem:[#allocation5 + $0x78] sm:$0xff]
    %v97 = vld [vmem:[%s2] sm:$0x1]
    %v99 = vlaneseq
    %v100 = vshrl.u32 %v99, 7
    %v101 = vsub.s32 0, %v100
    %v102 = vrot.slane %v97, %v101
    %104 = vmatprep.subr.mxu0 0.0
    %105 = vmatpush1.msra.mxu0 %v96
    %106 = vmatprep.subr.mxu0 0.0
    %107 = vmatpush1.msra.mxu0 %v95
    %108 = vmatprep.subr.mxu0 0.0
    %109 = vmatpush1.msra.mxu0 %v94
    %110 = vmatprep.subr.mxu0 0.0
    %111 = vmatpush1.msra.mxu0 %v93
    %112 = vmatprep.subr.mxu0 0.0
    %113 = vmatpush1.msra.mxu0 %v92
    %114 = vmatprep.subr.mxu0 0.0
    %115 = vmatpush1.msra.mxu0 %v91
    %116 = vmatprep.subr.mxu0 0.0
    %117 = vmatpush1.msra.mxu0 %v90
    %118 = vmatprep.subr.mxu0 0.0
    %119 = vmatpush1.msra.mxu0 %v89
    %120 = vmatprep.subr.mxu0 0.0
    %121 = vmatpush1.msra.mxu0 %v88
    %122 = vmatprep.subr.mxu0 0.0
    %123 = vmatpush1.msra.mxu0 %v87
    %124 = vmatprep.subr.mxu0 0.0
    %125 = vmatpush1.msra.mxu0 %v86
    %126 = vmatprep.subr.mxu0 0.0
    %127 = vmatpush1.msra.mxu0 %v85
    %128 = vmatprep.subr.mxu0 0.0
    %129 = vmatpush1.msra.mxu0 %v84
    %130 = vmatprep.subr.mxu0 0.0
    %131 = vmatpush1.msra.mxu0 %v83
    %132 = vmatprep.subr.mxu0 0.0
    %133 = vmatpush1.msra.mxu0 %v82
    %134 = vmatprep.subr.mxu0 0.0
    %135 = vmatpush1.msra.mxu0 %v81
    %136 = vmatprep.subr.mxu0 0.0
    %137 = vmatpush2.msra.mxu0 0.0
    %138 = vmatprep.subr.mxu0 0.0
    %139 = vmatpush2.msra.mxu0 0.0
    %140 = vmatprep.subr.mxu0 0.0
    %141 = vmatpush2.msra.mxu0 0.0
    %142 = vmatprep.subr.mxu0 0.0
    %143 = vmatpush2.msra.mxu0 0.0
    %144 = vmatprep.subr.mxu0 0.0
    %145 = vmatpush2.msra.mxu0 0.0
    %146 = vmatprep.subr.mxu0 0.0
    %147 = vmatpush2.msra.mxu0 0.0
    %148 = vmatprep.subr.mxu0 0.0
    %149 = vmatpush2.msra.mxu0 0.0
    %150 = vmatprep.subr.mxu0 0.0
    %151 = vmatpush2.msra.mxu0 0.0
    %152 = vmatprep.subr.mxu0 0.0
    %153 = vmatpush2.msra.mxu0 0.0
    %154 = vmatprep.subr.mxu0 0.0
    %155 = vmatpush2.msra.mxu0 0.0
    %156 = vmatprep.subr.mxu0 0.0
    %157 = vmatpush2.msra.mxu0 0.0
    %158 = vmatprep.subr.mxu0 0.0
    %159 = vmatpush2.msra.mxu0 0.0
    %160 = vmatprep.subr.mxu0 0.0
    %161 = vmatpush2.msra.mxu0 0.0
    %162 = vmatprep.subr.mxu0 0.0
    %163 = vmatpush2.msra.mxu0 0.0
    %164 = vmatprep.subr.mxu0 0.0
    %165 = vmatpush2.msra.mxu0 0.0
    %166 = vmatprep.subr.mxu0 0.0
    %167 = vmatpush2.msra.mxu0 0.0
    %168 = vmatprep.mubr.f32.mxu0 0.0
    %169 = vmatmul.mubr.f32.gmra.mxu0 %v80
    %v170 = vpop.f32.mrf.mxu0
    %v171 = vadd.f32 %v102, %v170
    %v172 = vpop.f32.mrf.mxu0
    %173 = vdwg.mxu0
    %v174 = vmax.f32 %v171, 0.0
    %v175 = vld [vmem:[#allocation7] sm:$0xff]
    %v176 = vld [vmem:[#allocation7 + $0x8] sm:$0xff]
    %v177 = vld [vmem:[#allocation7 + $0x10] sm:$0xff]
    %v178 = vld [vmem:[#allocation7 + $0x18] sm:$0xff]
    %v179 = vld [vmem:[#allocation7 + $0x20] sm:$0xff]
    %v180 = vld [vmem:[#allocation7 + $0x28] sm:$0xff]
    %v181 = vld [vmem:[#allocation7 + $0x30] sm:$0xff]
    %v182 = vld [vmem:[#allocation7 + $0x38] sm:$0xff]
    %v183 = vld [vmem:[#allocation7 + $0x40] sm:$0xff]
    %v184 = vld [vmem:[#allocation7 + $0x48] sm:$0xff]
    %v185 = vld [vmem:[#allocation7 + $0x50] sm:$0xff]
    %v186 = vld [vmem:[#allocation7 + $0x58] sm:$0xff]
    %v187 = vld [vmem:[#allocation7 + $0x60] sm:$0xff]
    %v188 = vld [vmem:[#allocation7 + $0x68] sm:$0xff]
    %v189 = vld [vmem:[#allocation7 + $0x70] sm:$0xff]
    %v190 = vld [vmem:[#allocation7 + $0x78] sm:$0xff]
    %v191 = vld [vmem:[%s4] sm:$0x1]
    %v193 = vlaneseq
    %v194 = vshrl.u32 %v193, 7
    %v195 = vsub.s32 0, %v194
    %v196 = vrot.slane %v191, %v195
    %198 = vmatprep.subr.mxu0 0.0
    %199 = vmatpush1.msra.mxu0 %v190
    %200 = vmatprep.subr.mxu0 0.0
    %201 = vmatpush1.msra.mxu0 %v189
    %202 = vmatprep.subr.mxu0 0.0
    %203 = vmatpush1.msra.mxu0 %v188
    %204 = vmatprep.subr.mxu0 0.0
    %205 = vmatpush1.msra.mxu0 %v187
    %206 = vmatprep.subr.mxu0 0.0
    %207 = vmatpush1.msra.mxu0 %v186
    %208 = vmatprep.subr.mxu0 0.0
    %209 = vmatpush1.msra.mxu0 %v185
    %210 = vmatprep.subr.mxu0 0.0
    %211 = vmatpush1.msra.mxu0 %v184
    %212 = vmatprep.subr.mxu0 0.0
    %213 = vmatpush1.msra.mxu0 %v183
    %214 = vmatprep.subr.mxu0 0.0
    %215 = vmatpush1.msra.mxu0 %v182
    %216 = vmatprep.subr.mxu0 0.0
    %217 = vmatpush1.msra.mxu0 %v181
    %218 = vmatprep.subr.mxu0 0.0
    %219 = vmatpush1.msra.mxu0 %v180
    %220 = vmatprep.subr.mxu0 0.0
    %221 = vmatpush1.msra.mxu0 %v179
    %222 = vmatprep.subr.mxu0 0.0
    %223 = vmatpush1.msra.mxu0 %v178
    %224 = vmatprep.subr.mxu0 0.0
    %225 = vmatpush1.msra.mxu0 %v177
    %226 = vmatprep.subr.mxu0 0.0
    %227 = vmatpush1.msra.mxu0 %v176
    %228 = vmatprep.subr.mxu0 0.0
    %229 = vmatpush1.msra.mxu0 %v175
    %230 = vmatprep.subr.mxu0 0.0
    %231 = vmatpush2.msra.mxu0 0.0
    %232 = vmatprep.subr.mxu0 0.0
    %233 = vmatpush2.msra.mxu0 0.0
    %234 = vmatprep.subr.mxu0 0.0
    %235 = vmatpush2.msra.mxu0 0.0
    %236 = vmatprep.subr.mxu0 0.0
    %237 = vmatpush2.msra.mxu0 0.0
    %238 = vmatprep.subr.mxu0 0.0
    %239 = vmatpush2.msra.mxu0 0.0
    %240 = vmatprep.subr.mxu0 0.0
    %241 = vmatpush2.msra.mxu0 0.0
    %242 = vmatprep.subr.mxu0 0.0
    %243 = vmatpush2.msra.mxu0 0.0
    %244 = vmatprep.subr.mxu0 0.0
    %245 = vmatpush2.msra.mxu0 0.0
    %246 = vmatprep.subr.mxu0 0.0
    %247 = vmatpush2.msra.mxu0 0.0
    %248 = vmatprep.subr.mxu0 0.0
    %249 = vmatpush2.msra.mxu0 0.0
    %250 = vmatprep.subr.mxu0 0.0
    %251 = vmatpush2.msra.mxu0 0.0
    %252 = vmatprep.subr.mxu0 0.0
    %253 = vmatpush2.msra.mxu0 0.0
    %254 = vmatprep.subr.mxu0 0.0
    %255 = vmatpush2.msra.mxu0 0.0
    %256 = vmatprep.subr.mxu0 0.0
    %257 = vmatpush2.msra.mxu0 0.0
    %258 = vmatprep.subr.mxu0 0.0
    %259 = vmatpush2.msra.mxu0 0.0
    %260 = vmatprep.subr.mxu0 0.0
    %261 = vmatpush2.msra.mxu0 0.0
    %262 = vmatprep.mubr.f32.mxu0 0.0
    %263 = vmatmul.mubr.f32.gmra.mxu0 %v174
    %v264 = vpop.f32.mrf.mxu0
    %v265 = vadd.f32 %v196, %v264
    %v266 = vpop.f32.mrf.mxu0
    %267 = vdwg.mxu0
    %v268 = vmax.f32 %v265, 0.0
    %v269 = vld [vmem:[#allocation8] sm:$0xff]
    %v270 = vld [vmem:[#allocation8 + $0x8] sm:$0xff]
    %v271 = vld [vmem:[#allocation8 + $0x10] sm:$0xff]
    %v272 = vld [vmem:[#allocation8 + $0x18] sm:$0xff]
    %v273 = vld [vmem:[#allocation8 + $0x20] sm:$0xff]
    %v274 = vld [vmem:[#allocation8 + $0x28] sm:$0xff]
    %v275 = vld [vmem:[#allocation8 + $0x30] sm:$0xff]
    %v276 = vld [vmem:[#allocation8 + $0x38] sm:$0xff]
    %v277 = vld [vmem:[#allocation8 + $0x40] sm:$0xff]
    %v278 = vld [vmem:[#allocation8 + $0x48] sm:$0xff]
    %v279 = vld [vmem:[#allocation8 + $0x50] sm:$0xff]
    %v280 = vld [vmem:[#allocation8 + $0x58] sm:$0xff]
    %v281 = vld [vmem:[#allocation8 + $0x60] sm:$0xff]
    %v282 = vld [vmem:[#allocation8 + $0x68] sm:$0xff]
    %v283 = vld [vmem:[#allocation8 + $0x70] sm:$0xff]
    %v284 = vld [vmem:[#allocation8 + $0x78] sm:$0xff]
    %v285 = vld [vmem:[%s6] sm:$0x1]
    %v287 = vlaneseq
    %v288 = vshrl.u32 %v287, 7
    %v289 = vsub.s32 0, %v288
    %v290 = vrot.slane %v285, %v289
    %292 = vmatprep.subr.mxu0 0.0
    %293 = vmatpush1.msra.mxu0 %v284
    %294 = vmatprep.subr.mxu0 0.0
    %295 = vmatpush1.msra.mxu0 %v283
    %296 = vmatprep.subr.mxu0 0.0
    %297 = vmatpush1.msra.mxu0 %v282
    %298 = vmatprep.subr.mxu0 0.0
    %299 = vmatpush1.msra.mxu0 %v281
    %300 = vmatprep.subr.mxu0 0.0
    %301 = vmatpush1.msra.mxu0 %v280
    %302 = vmatprep.subr.mxu0 0.0
    %303 = vmatpush1.msra.mxu0 %v279
    %304 = vmatprep.subr.mxu0 0.0
    %305 = vmatpush1.msra.mxu0 %v278
    %306 = vmatprep.subr.mxu0 0.0
    %307 = vmatpush1.msra.mxu0 %v277
    %308 = vmatprep.subr.mxu0 0.0
    %309 = vmatpush1.msra.mxu0 %v276
    %310 = vmatprep.subr.mxu0 0.0
    %311 = vmatpush1.msra.mxu0 %v275
    %312 = vmatprep.subr.mxu0 0.0
    %313 = vmatpush1.msra.mxu0 %v274
    %314 = vmatprep.subr.mxu0 0.0
    %315 = vmatpush1.msra.mxu0 %v273
    %316 = vmatprep.subr.mxu0 0.0
    %317 = vmatpush1.msra.mxu0 %v272
    %318 = vmatprep.subr.mxu0 0.0
    %319 = vmatpush1.msra.mxu0 %v271
    %320 = vmatprep.subr.mxu0 0.0
    %321 = vmatpush1.msra.mxu0 %v270
    %322 = vmatprep.subr.mxu0 0.0
    %323 = vmatpush1.msra.mxu0 %v269
    %324 = vmatprep.subr.mxu0 0.0
    %325 = vmatpush2.msra.mxu0 0.0
    %326 = vmatprep.subr.mxu0 0.0
    %327 = vmatpush2.msra.mxu0 0.0
    %328 = vmatprep.subr.mxu0 0.0
    %329 = vmatpush2.msra.mxu0 0.0
    %330 = vmatprep.subr.mxu0 0.0
    %331 = vmatpush2.msra.mxu0 0.0
    %332 = vmatprep.subr.mxu0 0.0
    %333 = vmatpush2.msra.mxu0 0.0
    %334 = vmatprep.subr.mxu0 0.0
    %335 = vmatpush2.msra.mxu0 0.0
    %336 = vmatprep.subr.mxu0 0.0
    %337 = vmatpush2.msra.mxu0 0.0
    %338 = vmatprep.subr.mxu0 0.0
    %339 = vmatpush2.msra.mxu0 0.0
    %340 = vmatprep.subr.mxu0 0.0
    %341 = vmatpush2.msra.mxu0 0.0
    %342 = vmatprep.subr.mxu0 0.0
    %343 = vmatpush2.msra.mxu0 0.0
    %344 = vmatprep.subr.mxu0 0.0
    %345 = vmatpush2.msra.mxu0 0.0
    %346 = vmatprep.subr.mxu0 0.0
    %347 = vmatpush2.msra.mxu0 0.0
    %348 = vmatprep.subr.mxu0 0.0
    %349 = vmatpush2.msra.mxu0 0.0
    %350 = vmatprep.subr.mxu0 0.0
    %351 = vmatpush2.msra.mxu0 0.0
    %352 = vmatprep.subr.mxu0 0.0
    %353 = vmatpush2.msra.mxu0 0.0
    %354 = vmatprep.subr.mxu0 0.0
    %355 = vmatpush2.msra.mxu0 0.0
    %356 = vmatprep.mubr.f32.mxu0 0.0
    %357 = vmatmul.mubr.f32.gmra.mxu0 %v268
    %v358 = vpop.f32.mrf.mxu0
    %v359 = vadd.f32 %v290, %v358
    %v360 = vpop.f32.mrf.mxu0
    %361 = vdwg.mxu0
    %362 = vst [vmem:[#allocation10] sm:$0xff] %v359
    // Predicated region
    $region46: #{tpu_custom_call.1} parent=1 // pred_check
      _
    $region47: #{tpu_custom_call.1} parent=1 // pred_check_branch
      %364 = sbr.rel (0) target = $region49
    $region48: #{tpu_custom_call.1} parent=1 // pred_region
      %s366 = ssub.s32 128, 128
      %367 = vsyncadd [#allocation4], %s366
      %s369 = sshll.u32 [#allocation10], 4
      %s370 = int_to_ptr.vmem [resolvable:$true] %s369
      %372 = dma.vmem_to_hbm [thread:$0]  %s370, 128, %s7, [#allocation4]
    $region49: #{tpu_custom_call.1} parent=1 // pred_fallthru
      _
    // Predicated region
    $region50: #{tpu_custom_call.1} parent=1 // pred_check
      _
    $region51: #{tpu_custom_call.1} parent=1 // pred_check_branch
      %374 = sbr.rel (0) target = $region53
    $region52: #{tpu_custom_call.1} parent=1 // pred_region
      %375 = dma.done [#allocation4], 128
    $region53: #{tpu_custom_call.1} parent=1 // pred_fallthru
      _
    %376 = vsyncpa [#allocation3], 1
    %377 = vsyncpa [#allocation6], 1
    %378 = vsyncpa [#allocation9], 1
    %379 = vsyncpa [#allocation4], 1

// kernel: tpu_custom_call.1
$region0: #{tpu_custom_call.1}
  #allocation0 [shape = 'u32[]', space=smem, size = 0x4, offset = 0x4, fixed_abs, tag = 'smem constant byte address 0x4 - core index']
  #allocation1 [shape = 'u32[144,128]{1,0:T(1,128)}', space=vmem, size = 0x12000, scoped, tag = 'internal scratch']
  %s0 = inlined_call_operand.hbm [shape: f32[8,128], index: 0, kind: input, shape index: {}]
  %s1 = inlined_call_operand.hbm [shape: f32[128,128], index: 1, kind: input, shape index: {}]
  %s2 = inlined_call_operand.vmem [shape: f32[1,128], index: 2, kind: input, shape index: {}]
  %s3 = inlined_call_operand.hbm [shape: f32[128,128], index: 3, kind: input, shape index: {}]
  %s4 = inlined_call_operand.vmem [shape: f32[1,128], index: 4, kind: input, shape index: {}]
  %s5 = inlined_call_operand.hbm [shape: f32[128,128], index: 5, kind: input, shape index: {}]
  %s6 = inlined_call_operand.vmem [shape: f32[1,128], index: 6, kind: input, shape index: {}]
  %s7 = inlined_call_operand.hbm [shape: f32[8,128], index: 7, kind: output, shape index: {}]
  %s8 = sld [smem:[#allocation0]]
  $region54: #{tpu_custom_call.1} parent=0
    _
  %s10 = ssub.s32 1, %s8
  %s11 = scalar_select 0, %s10, %s8
  $region1: #{tpu_custom_call.1} parent=0
    #allocation2 [shape = 'u8[4096]{0}', space=vmem, size = 0x1000, scoped, tag = 'input window, operand 0, single buffered']
    #allocation3 [shape = 's32[1]{0}', space=sflag, size = 0x4, scoped, tag = 'scoped memory for tpu_custom_call.1']
    #allocation4 [shape = 's32[1]{0}', space=sflag, size = 0x4, scoped, tag = 'scoped memory for tpu_custom_call.1']
    #allocation5 [shape = 'u8[65536]{0}', space=vmem, size = 0x10000, scoped, tag = 'input window, operand 1, single buffered']
    #allocation6 [shape = 's32[1]{0}', space=sflag, size = 0x4, scoped, tag = 'scoped memory for tpu_custom_call.1']
    #allocation7 [shape = 'u8[65536]{0}', space=vmem, size = 0x10000, scoped, tag = 'input window, operand 3, single buffered']
    #allocation8 [shape = 'u8[65536]{0}', space=vmem, size = 0x10000, scoped, tag = 'input window, operand 5, single buffered']
    #allocation9 [shape = 's32[1]{0}', space=sflag, size = 0x4, scoped, tag = 'scoped memory for tpu_custom_call.1']
    #allocation10 [shape = 'u8[4096]{0}', space=vmem, size = 0x1000, scoped, tag = 'output window, operand 0, single buffered']
    %12 = vsyncpa [#allocation3], 0
    %13 = vsyncpa [#allocation6], 0
    %14 = vsyncpa [#allocation9], 0
    %15 = vsyncpa [#allocation4], 0
    // Predicated region
    $region2: #{tpu_custom_call.1} parent=1 // pred_check
      _
    $region3: #{tpu_custom_call.1} parent=1 // pred_check_branch
      %17 = sbr.rel (0) target = $region5
    $region4: #{tpu_custom_call.1} parent=1 // pred_region
      %s19 = ssub.s32 128, 128
      %20 = vsyncadd [#allocation3], %s19
      %s22 = sshll.u32 [#allocation2], 4
      %s23 = int_to_ptr.vmem [resolvable:$true] %s22
      %25 = dma.hbm_to_vmem [thread:$0]  %s0, 128, %s23, [#allocation3]
    $region5: #{tpu_custom_call.1} parent=1 // pred_fallthru
      _
    // Predicated region
    $region6: #{tpu_custom_call.1} parent=1 // pred_check
      _
    $region7: #{tpu_custom_call.1} parent=1 // pred_check_branch
      %27 = sbr.rel (0) target = $region9
    $region8: #{tpu_custom_call.1} parent=1 // pred_region
      %s29 = ssub.s32 2048, 2048
      %30 = vsyncadd [#allocation6], %s29
      %s31 = sshll.u32 [#allocation5], 4
      %s32 = int_to_ptr.vmem [resolvable:$true] %s31
      %37 = dma.hbm_to_vmem [thread:$0]  %s1, 2048, %s32, [#allocation6], 128, 128, 8
    $region9: #{tpu_custom_call.1} parent=1 // pred_fallthru
      _
    // Predicated region
    $region10: #{tpu_custom_call.1} parent=1 // pred_check
      _
    $region11: #{tpu_custom_call.1} parent=1 // pred_check_branch
      %39 = sbr.rel (0) target = $region13
    $region12: #{tpu_custom_call.1} parent=1 // pred_region
      _
    $region13: #{tpu_custom_call.1} parent=1 // pred_fallthru
      _
    // Predicated region
    $region14: #{tpu_custom_call.1} parent=1 // pred_check
      _
    $region15: #{tpu_custom_call.1} parent=1 // pred_check_branch
      %41 = sbr.rel (0) target = $region17
    $region16: #{tpu_custom_call.1} parent=1 // pred_region
      %s43 = ssub.s32 2048, 2048
      %44 = vsyncadd [#allocation6], %s43
      %s45 = sshll.u32 [#allocation7], 4
      %s46 = int_to_ptr.vmem [resolvable:$true] %s45
      %51 = dma.hbm_to_vmem [thread:$0]  %s3, 2048, %s46, [#allocation6], 128, 128, 8
    $region17: #{tpu_custom_call.1} parent=1 // pred_fallthru
      _
    // Predicated region
    $region18: #{tpu_custom_call.1} parent=1 // pred_check
      _
    $region19: #{tpu_custom_call.1} parent=1 // pred_check_branch
      %53 = sbr.rel (0) target = $region21
    $region20: #{tpu_custom_call.1} parent=1 // pred_region
      _
    $region21: #{tpu_custom_call.1} parent=1 // pred_fallthru
      _
    // Predicated region
    $region22: #{tpu_custom_call.1} parent=1 // pred_check
      _
    $region23: #{tpu_custom_call.1} parent=1 // pred_check_branch
      %55 = sbr.rel (0) target = $region25
    $region24: #{tpu_custom_call.1} parent=1 // pred_region
      %s57 = ssub.s32 2048, 2048
      %58 = vsyncadd [#allocation9], %s57
      %s59 = sshll.u32 [#allocation8], 4
      %s60 = int_to_ptr.vmem [resolvable:$true] %s59
      %65 = dma.hbm_to_vmem [thread:$0]  %s5, 2048, %s60, [#allocation9], 128, 128, 8
    $region25: #{tpu_custom_call.1} parent=1 // pred_fallthru
      _
    // Predicated region
    $region26: #{tpu_custom_call.1} parent=1 // pred_check
      _
    $region27: #{tpu_custom_call.1} parent=1 // pred_check_branch
      %67 = sbr.rel (0) target = $region29
    $region28: #{tpu_custom_call.1} parent=1 // pred_region
      _
    $region29: #{tpu_custom_call.1} parent=1 // pred_fallthru
      _
    // Predicated region
    $region30: #{tpu_custom_call.1} parent=1 // pred_check
      _
    $region31: #{tpu_custom_call.1} parent=1 // pred_check_branch
      %69 = sbr.rel (0) target = $region33
    $region32: #{tpu_custom_call.1} parent=1 // pred_region
      %70 = dma.done [#allocation3], 128
    $region33: #{tpu_custom_call.1} parent=1 // pred_fallthru
      _
    // Predicated region
    $region34: #{tpu_custom_call.1} parent=1 // pred_check
      _
    $region35: #{tpu_custom_call.1} parent=1 // pred_check_branch
      %72 = sbr.rel (0) target = $region37
    $region36: #{tpu_custom_call.1} parent=1 // pred_region
      %73 = dma.done [#allocation6], 2048
    $region37: #{tpu_custom_call.1} parent=1 // pred_fallthru
      _
    // Predicated region
    $region38: #{tpu_custom_call.1} parent=1 // pred_check
      _
    $region39: #{tpu_custom_call.1} parent=1 // pred_check_branch
      %75 = sbr.rel (0) target = $region41
    $region40: #{tpu_custom_call.1} parent=1 // pred_region
      %76 = dma.done [#allocation6], 2048
    $region41: #{tpu_custom_call.1} parent=1 // pred_fallthru
      _
    // Predicated region
    $region42: #{tpu_custom_call.1} parent=1 // pred_check
      _
    $region43: #{tpu_custom_call.1} parent=1 // pred_check_branch
      %78 = sbr.rel (0) target = $region45
    $region44: #{tpu_custom_call.1} parent=1 // pred_region
      %79 = dma.done [#allocation9], 2048
    $region45: #{tpu_custom_call.1} parent=1 // pred_fallthru
      _
    %v80 = vld [vmem:[#allocation2] sm:$0xff]
    %v81 = vld [vmem:[#allocation5] sm:$0xff]
    %v82 = vld [vmem:[#allocation5 + $0x8] sm:$0xff]
    %v83 = vld [vmem:[#allocation5 + $0x10] sm:$0xff]
    %v84 = vld [vmem:[#allocation5 + $0x18] sm:$0xff]
    %v85 = vld [vmem:[#allocation5 + $0x20] sm:$0xff]
    %v86 = vld [vmem:[#allocation5 + $0x28] sm:$0xff]
    %v87 = vld [vmem:[#allocation5 + $0x30] sm:$0xff]
    %v88 = vld [vmem:[#allocation5 + $0x38] sm:$0xff]
    %v89 = vld [vmem:[#allocation5 + $0x40] sm:$0xff]
    %v90 = vld [vmem:[#allocation5 + $0x48] sm:$0xff]
    %v91 = vld [vmem:[#allocation5 + $0x50] sm:$0xff]
    %v92 = vld [vmem:[#allocation5 + $0x58] sm:$0xff]
    %v93 = vld [vmem:[#allocation5 + $0x60] sm:$0xff]
    %v94 = vld [vmem:[#allocation5 + $0x68] sm:$0xff]
    %v95 = vld [vmem:[#allocation5 + $0x70] sm:$0xff]
    %v96 = vld [vmem:[#allocation5 + $0x78] sm:$0xff]
    %v97 = vld [vmem:[%s2] sm:$0x1]
    %v99 = vlaneseq
    %v100 = vshrl.u32 %v99, 7
    %v101 = vsub.s32 0, %v100
    %v102 = vrot.slane %v97, %v101
    %104 = vmatprep.subr.mxu0 0.0
    %105 = vmatpush1.msra.mxu0 %v96
    %106 = vmatprep.subr.mxu0 0.0
    %107 = vmatpush1.msra.mxu0 %v95
    %108 = vmatprep.subr.mxu0 0.0
    %109 = vmatpush1.msra.mxu0 %v94
    %110 = vmatprep.subr.mxu0 0.0
    %111 = vmatpush1.msra.mxu0 %v93
    %112 = vmatprep.subr.mxu0 0.0
    %113 = vmatpush1.msra.mxu0 %v92
    %114 = vmatprep.subr.mxu0 0.0
    %115 = vmatpush1.msra.mxu0 %v91
    %116 = vmatprep.subr.mxu0 0.0
    %117 = vmatpush1.msra.mxu0 %v90
    %118 = vmatprep.subr.mxu0 0.0
    %119 = vmatpush1.msra.mxu0 %v89
    %120 = vmatprep.subr.mxu0 0.0
    %121 = vmatpush1.msra.mxu0 %v88
    %122 = vmatprep.subr.mxu0 0.0
    %123 = vmatpush1.msra.mxu0 %v87
    %124 = vmatprep.subr.mxu0 0.0
    %125 = vmatpush1.msra.mxu0 %v86
    %126 = vmatprep.subr.mxu0 0.0
    %127 = vmatpush1.msra.mxu0 %v85
    %128 = vmatprep.subr.mxu0 0.0
    %129 = vmatpush1.msra.mxu0 %v84
    %130 = vmatprep.subr.mxu0 0.0
    %131 = vmatpush1.msra.mxu0 %v83
    %132 = vmatprep.subr.mxu0 0.0
    %133 = vmatpush1.msra.mxu0 %v82
    %134 = vmatprep.subr.mxu0 0.0
    %135 = vmatpush1.msra.mxu0 %v81
    %136 = vmatprep.subr.mxu0 0.0
    %137 = vmatpush2.msra.mxu0 0.0
    %138 = vmatprep.subr.mxu0 0.0
    %139 = vmatpush2.msra.mxu0 0.0
    %140 = vmatprep.subr.mxu0 0.0
    %141 = vmatpush2.msra.mxu0 0.0
    %142 = vmatprep.subr.mxu0 0.0
    %143 = vmatpush2.msra.mxu0 0.0
    %144 = vmatprep.subr.mxu0 0.0
    %145 = vmatpush2.msra.mxu0 0.0
    %146 = vmatprep.subr.mxu0 0.0
    %147 = vmatpush2.msra.mxu0 0.0
    %148 = vmatprep.subr.mxu0 0.0
    %149 = vmatpush2.msra.mxu0 0.0
    %150 = vmatprep.subr.mxu0 0.0
    %151 = vmatpush2.msra.mxu0 0.0
    %152 = vmatprep.subr.mxu0 0.0
    %153 = vmatpush2.msra.mxu0 0.0
    %154 = vmatprep.subr.mxu0 0.0
    %155 = vmatpush2.msra.mxu0 0.0
    %156 = vmatprep.subr.mxu0 0.0
    %157 = vmatpush2.msra.mxu0 0.0
    %158 = vmatprep.subr.mxu0 0.0
    %159 = vmatpush2.msra.mxu0 0.0
    %160 = vmatprep.subr.mxu0 0.0
    %161 = vmatpush2.msra.mxu0 0.0
    %162 = vmatprep.subr.mxu0 0.0
    %163 = vmatpush2.msra.mxu0 0.0
    %164 = vmatprep.subr.mxu0 0.0
    %165 = vmatpush2.msra.mxu0 0.0
    %166 = vmatprep.subr.mxu0 0.0
    %167 = vmatpush2.msra.mxu0 0.0
    %168 = vmatprep.mubr.f32.mxu0 0.0
    %169 = vmatmul.mubr.f32.gmra.mxu0 %v80
    %v170 = vpop.f32.mrf.mxu0
    %v171 = vadd.f32 %v102, %v170
    %v172 = vpop.f32.mrf.mxu0
    %173 = vdwg.mxu0
    %v174 = vmax.f32 %v171, 0.0
    %v175 = vld [vmem:[#allocation7] sm:$0xff]
    %v176 = vld [vmem:[#allocation7 + $0x8] sm:$0xff]
    %v177 = vld [vmem:[#allocation7 + $0x10] sm:$0xff]
    %v178 = vld [vmem:[#allocation7 + $0x18] sm:$0xff]
    %v179 = vld [vmem:[#allocation7 + $0x20] sm:$0xff]
    %v180 = vld [vmem:[#allocation7 + $0x28] sm:$0xff]
    %v181 = vld [vmem:[#allocation7 + $0x30] sm:$0xff]
    %v182 = vld [vmem:[#allocation7 + $0x38] sm:$0xff]
    %v183 = vld [vmem:[#allocation7 + $0x40] sm:$0xff]
    %v184 = vld [vmem:[#allocation7 + $0x48] sm:$0xff]
    %v185 = vld [vmem:[#allocation7 + $0x50] sm:$0xff]
    %v186 = vld [vmem:[#allocation7 + $0x58] sm:$0xff]
    %v187 = vld [vmem:[#allocation7 + $0x60] sm:$0xff]
    %v188 = vld [vmem:[#allocation7 + $0x68] sm:$0xff]
    %v189 = vld [vmem:[#allocation7 + $0x70] sm:$0xff]
    %v190 = vld [vmem:[#allocation7 + $0x78] sm:$0xff]
    %v191 = vld [vmem:[%s4] sm:$0x1]
    %v193 = vlaneseq
    %v194 = vshrl.u32 %v193, 7
    %v195 = vsub.s32 0, %v194
    %v196 = vrot.slane %v191, %v195
    %198 = vmatprep.subr.mxu0 0.0
    %199 = vmatpush1.msra.mxu0 %v190
    %200 = vmatprep.subr.mxu0 0.0
    %201 = vmatpush1.msra.mxu0 %v189
    %202 = vmatprep.subr.mxu0 0.0
    %203 = vmatpush1.msra.mxu0 %v188
    %204 = vmatprep.subr.mxu0 0.0
    %205 = vmatpush1.msra.mxu0 %v187
    %206 = vmatprep.subr.mxu0 0.0
    %207 = vmatpush1.msra.mxu0 %v186
    %208 = vmatprep.subr.mxu0 0.0
    %209 = vmatpush1.msra.mxu0 %v185
    %210 = vmatprep.subr.mxu0 0.0
    %211 = vmatpush1.msra.mxu0 %v184
    %212 = vmatprep.subr.mxu0 0.0
    %213 = vmatpush1.msra.mxu0 %v183
    %214 = vmatprep.subr.mxu0 0.0
    %215 = vmatpush1.msra.mxu0 %v182
    %216 = vmatprep.subr.mxu0 0.0
    %217 = vmatpush1.msra.mxu0 %v181
    %218 = vmatprep.subr.mxu0 0.0
    %219 = vmatpush1.msra.mxu0 %v180
    %220 = vmatprep.subr.mxu0 0.0
    %221 = vmatpush1.msra.mxu0 %v179
    %222 = vmatprep.subr.mxu0 0.0
    %223 = vmatpush1.msra.mxu0 %v178
    %224 = vmatprep.subr.mxu0 0.0
    %225 = vmatpush1.msra.mxu0 %v177
    %226 = vmatprep.subr.mxu0 0.0
    %227 = vmatpush1.msra.mxu0 %v176
    %228 = vmatprep.subr.mxu0 0.0
    %229 = vmatpush1.msra.mxu0 %v175
    %230 = vmatprep.subr.mxu0 0.0
    %231 = vmatpush2.msra.mxu0 0.0
    %232 = vmatprep.subr.mxu0 0.0
    %233 = vmatpush2.msra.mxu0 0.0
    %234 = vmatprep.subr.mxu0 0.0
    %235 = vmatpush2.msra.mxu0 0.0
    %236 = vmatprep.subr.mxu0 0.0
    %237 = vmatpush2.msra.mxu0 0.0
    %238 = vmatprep.subr.mxu0 0.0
    %239 = vmatpush2.msra.mxu0 0.0
    %240 = vmatprep.subr.mxu0 0.0
    %241 = vmatpush2.msra.mxu0 0.0
    %242 = vmatprep.subr.mxu0 0.0
    %243 = vmatpush2.msra.mxu0 0.0
    %244 = vmatprep.subr.mxu0 0.0
    %245 = vmatpush2.msra.mxu0 0.0
    %246 = vmatprep.subr.mxu0 0.0
    %247 = vmatpush2.msra.mxu0 0.0
    %248 = vmatprep.subr.mxu0 0.0
    %249 = vmatpush2.msra.mxu0 0.0
    %250 = vmatprep.subr.mxu0 0.0
    %251 = vmatpush2.msra.mxu0 0.0
    %252 = vmatprep.subr.mxu0 0.0
    %253 = vmatpush2.msra.mxu0 0.0
    %254 = vmatprep.subr.mxu0 0.0
    %255 = vmatpush2.msra.mxu0 0.0
    %256 = vmatprep.subr.mxu0 0.0
    %257 = vmatpush2.msra.mxu0 0.0
    %258 = vmatprep.subr.mxu0 0.0
    %259 = vmatpush2.msra.mxu0 0.0
    %260 = vmatprep.subr.mxu0 0.0
    %261 = vmatpush2.msra.mxu0 0.0
    %262 = vmatprep.mubr.f32.mxu0 0.0
    %263 = vmatmul.mubr.f32.gmra.mxu0 %v174
    %v264 = vpop.f32.mrf.mxu0
    %v265 = vadd.f32 %v196, %v264
    %v266 = vpop.f32.mrf.mxu0
    %267 = vdwg.mxu0
    %v268 = vmax.f32 %v265, 0.0
    %v269 = vld [vmem:[#allocation8] sm:$0xff]
    %v270 = vld [vmem:[#allocation8 + $0x8] sm:$0xff]
    %v271 = vld [vmem:[#allocation8 + $0x10] sm:$0xff]
    %v272 = vld [vmem:[#allocation8 + $0x18] sm:$0xff]
    %v273 = vld [vmem:[#allocation8 + $0x20] sm:$0xff]
    %v274 = vld [vmem:[#allocation8 + $0x28] sm:$0xff]
    %v275 = vld [vmem:[#allocation8 + $0x30] sm:$0xff]
    %v276 = vld [vmem:[#allocation8 + $0x38] sm:$0xff]
    %v277 = vld [vmem:[#allocation8 + $0x40] sm:$0xff]
    %v278 = vld [vmem:[#allocation8 + $0x48] sm:$0xff]
    %v279 = vld [vmem:[#allocation8 + $0x50] sm:$0xff]
    %v280 = vld [vmem:[#allocation8 + $0x58] sm:$0xff]
    %v281 = vld [vmem:[#allocation8 + $0x60] sm:$0xff]
    %v282 = vld [vmem:[#allocation8 + $0x68] sm:$0xff]
    %v283 = vld [vmem:[#allocation8 + $0x70] sm:$0xff]
    %v284 = vld [vmem:[#allocation8 + $0x78] sm:$0xff]
    %v285 = vld [vmem:[%s6] sm:$0x1]
    %v287 = vlaneseq
    %v288 = vshrl.u32 %v287, 7
    %v289 = vsub.s32 0, %v288
    %v290 = vrot.slane %v285, %v289
    %292 = vmatprep.subr.mxu0 0.0
    %293 = vmatpush1.msra.mxu0 %v284
    %294 = vmatprep.subr.mxu0 0.0
    %295 = vmatpush1.msra.mxu0 %v283
    %296 = vmatprep.subr.mxu0 0.0
    %297 = vmatpush1.msra.mxu0 %v282
    %298 = vmatprep.subr.mxu0 0.0
    %299 = vmatpush1.msra.mxu0 %v281
    %300 = vmatprep.subr.mxu0 0.0
    %301 = vmatpush1.msra.mxu0 %v280
    %302 = vmatprep.subr.mxu0 0.0
    %303 = vmatpush1.msra.mxu0 %v279
    %304 = vmatprep.subr.mxu0 0.0
    %305 = vmatpush1.msra.mxu0 %v278
    %306 = vmatprep.subr.mxu0 0.0
    %307 = vmatpush1.msra.mxu0 %v277
    %308 = vmatprep.subr.mxu0 0.0
    %309 = vmatpush1.msra.mxu0 %v276
    %310 = vmatprep.subr.mxu0 0.0
    %311 = vmatpush1.msra.mxu0 %v275
    %312 = vmatprep.subr.mxu0 0.0
    %313 = vmatpush1.msra.mxu0 %v274
    %314 = vmatprep.subr.mxu0 0.0
    %315 = vmatpush1.msra.mxu0 %v273
    %316 = vmatprep.subr.mxu0 0.0
    %317 = vmatpush1.msra.mxu0 %v272
    %318 = vmatprep.subr.mxu0 0.0
    %319 = vmatpush1.msra.mxu0 %v271
    %320 = vmatprep.subr.mxu0 0.0
    %321 = vmatpush1.msra.mxu0 %v270
    %322 = vmatprep.subr.mxu0 0.0
    %323 = vmatpush1.msra.mxu0 %v269
    %324 = vmatprep.subr.mxu0 0.0
    %325 = vmatpush2.msra.mxu0 0.0
    %326 = vmatprep.subr.mxu0 0.0
    %327 = vmatpush2.msra.mxu0 0.0
    %328 = vmatprep.subr.mxu0 0.0
    %329 = vmatpush2.msra.mxu0 0.0
    %330 = vmatprep.subr.mxu0 0.0
    %331 = vmatpush2.msra.mxu0 0.0
    %332 = vmatprep.subr.mxu0 0.0
    %333 = vmatpush2.msra.mxu0 0.0
    %334 = vmatprep.subr.mxu0 0.0
    %335 = vmatpush2.msra.mxu0 0.0
    %336 = vmatprep.subr.mxu0 0.0
    %337 = vmatpush2.msra.mxu0 0.0
    %338 = vmatprep.subr.mxu0 0.0
    %339 = vmatpush2.msra.mxu0 0.0
    %340 = vmatprep.subr.mxu0 0.0
    %341 = vmatpush2.msra.mxu0 0.0
    %342 = vmatprep.subr.mxu0 0.0
    %343 = vmatpush2.msra.mxu0 0.0
    %344 = vmatprep.subr.mxu0 0.0
    %345 = vmatpush2.msra.mxu0 0.0
    %346 = vmatprep.subr.mxu0 0.0
    %347 = vmatpush2.msra.mxu0 0.0
    %348 = vmatprep.subr.mxu0 0.0
    %349 = vmatpush2.msra.mxu0 0.0
    %350 = vmatprep.subr.mxu0 0.0
    %351 = vmatpush2.msra.mxu0 0.0
    %352 = vmatprep.subr.mxu0 0.0
    %353 = vmatpush2.msra.mxu0 0.0
    %354 = vmatprep.subr.mxu0 0.0
    %355 = vmatpush2.msra.mxu0 0.0
    %356 = vmatprep.mubr.f32.mxu0 0.0
    %357 = vmatmul.mubr.f32.gmra.mxu0 %v268
    %v358 = vpop.f32.mrf.mxu0
    %v359 = vadd.f32 %v290, %v358
    %v360 = vpop.f32.mrf.mxu0
    %361 = vdwg.mxu0
    %362 = vst [vmem:[#allocation10] sm:$0xff] %v359
    // Predicated region
    $region46: #{tpu_custom_call.1} parent=1 // pred_check
      _
    $region47: #{tpu_custom_call.1} parent=1 // pred_check_branch
      %364 = sbr.rel (0) target = $region49
    $region48: #{tpu_custom_call.1} parent=1 // pred_region
      %s366 = ssub.s32 128, 128
      %367 = vsyncadd [#allocation4], %s366
      %s369 = sshll.u32 [#allocation10], 4
      %s370 = int_to_ptr.vmem [resolvable:$true] %s369
      %372 = dma.vmem_to_hbm [thread:$0]  %s370, 128, %s7, [#allocation4]
    $region49: #{tpu_custom_call.1} parent=1 // pred_fallthru
      _
    // Predicated region
    $region50: #{tpu_custom_call.1} parent=1 // pred_check
      _
    $region51: #{tpu_custom_call.1} parent=1 // pred_check_branch
      %374 = sbr.rel (0) target = $region53
    $region52: #{tpu_custom_call.1} parent=1 // pred_region
      %375 = dma.done [#allocation4], 128
    $region53: #{tpu_custom_call.1} parent=1 // pred_fallthru
      _
    %376 = vsyncpa [#allocation3], 1
    %377 = vsyncpa [#allocation6], 1
    %378 = vsyncpa [#allocation9], 1
    %379 = vsyncpa [#allocation4], 1

</llo_original>
